<compile_context>
chip_gen: v5e
topology: v5e:2x2
jax: 0.10.0
libtpu: 0.0.40
codegen_flags: <defaults>
</compile_context>

<pallas_src>
import functools
import math

import jax
import jax.numpy as jnp
from jax.experimental import pallas as pl
from jax.experimental.pallas import tpu as pltpu


def attn_kernel(hw_ref, enc_ref, w2t_ref, v_ref, out_ref, scores_ref,
                *, valid_s, tanh_dtype):
    # hw_ref:     (B, H)   f32   hidden @ W1.T + b (precomputed in wrapper, resident)
    # enc_ref:    (tS, H)        encoder slab for (batch bi, sequence tile si), pipelined
    # w2t_ref:    (H, H)         W[:, H:].T (encoder-side weights, resident)
    # v_ref:      (1, H)         scoring vector (resident)
    # out_ref:    (1, 1, S_pad)  softmax weights for batch bi (resident across si)
    # scores_ref: (1, S_pad)     VMEM scratch holding raw scores for the current batch
    bi = pl.program_id(0)
    si = pl.program_id(1)
    tS = enc_ref.shape[0]
    S_pad = scores_ref.shape[1]

    # Per-batch hidden-side term: single dynamic (1, H) sublane load — the matmul, bias
    # broadcast and row-select were hoisted out of the sequence loop.
    hw_row = hw_ref[pl.ds(bi, 1), :]                                           # (1, H) f32

    # Encoder-side projection on the MXU with f32 accumulation.
    ew = jnp.dot(enc_ref[...], w2t_ref[...],
                 preferred_element_type=jnp.float32)                           # (tS, H) f32

    # tanh on the EUP.  tanh_dtype=bf16 is worthwhile on v6e/v7x bf16 paths; keep f32 on
    # v5e (no bf16 VPU/EUP).
    energy = jnp.tanh((ew + hw_row).astype(tanh_dtype))                        # (tS, H)

    # score = v . energy via the MXU (contract H): (1, H) x (tS, H) -> (1, tS).
    sc = jax.lax.dot_general(
        v_ref[...].astype(energy.dtype), energy,
        dimension_numbers=(((1,), (1,)), ((), ())),
        preferred_element_type=jnp.float32)                                    # (1, tS)

    off = pl.multiple_of(si * tS, tS)
    scores_ref[:, pl.ds(off, tS)] = sc

    # Finalize: softmax over the full sequence once every tile's scores are resident.
    @pl.when(si == pl.num_programs(1) - 1)
    def _finalize():
        s_all = scores_ref[...]                                                # (1, S_pad)
        if valid_s < S_pad:
            # Static padding case: mask the garbage tail (OOB rows of the last enc
            # block) to -inf so it contributes exactly zero to the softmax.
            col = jax.lax.broadcasted_iota(jnp.int32, s_all.shape, 1)
            s_all = jnp.where(col < valid_s, s_all, -jnp.inf)
        m = jnp.max(s_all, axis=-1, keepdims=True)
        e = jnp.exp(s_all - m)
        denom = jnp.sum(e, axis=-1, keepdims=True)
        p = e * pl.reciprocal(denom, approx=True)        # divide on the (idle) EUP slot
        out_ref[...] = p.reshape(1, 1, S_pad).astype(out_ref.dtype)


def _round_up(x, m):
    return (x + m - 1) // m * m


def _vmem_budget_bytes():
    """Chip-aware kernel VMEM budget (drives tile sizing and the scoped-VMEM limit)."""
    try:
        cap = pltpu.get_tpu_info().vmem_capacity_bytes
    except Exception:
        cap = 128 << 20
    if cap <= (64 << 20):      # v7x-class TensorCore: 64 MiB physical VMEM
        return 26 << 20
    return 72 << 20            # v5e / v6e: 128 MiB physical (default scoped 16/32 MiB)


def _pick_seq_tile(S, H, itemsize, vmem_budget):
    """Largest 128-multiple sequence tile whose *total* per-step footprint fits budget:
    double-buffered enc stream plus ~12 B/element of f32 ew/energy temporaries plus the
    small resident blocks (W2.T, v, hw, score scratch, output)."""
    bytes_per_row = (2 * itemsize + 12) * H
    resident = H * H * itemsize + 16 * H + 16 * _round_up(S, 128)
    avail = max(vmem_budget - resident, 1 << 20)
    rows = max(128, (avail // bytes_per_row) // 128 * 128)
    if S <= rows:
        return S               # single exact tile: no padding, no finalize masking
    return int(rows)


def attn_forward(hidden, encoder_outputs, W, b, v, *, seq_tile=None, tanh_dtype=None):
    """hidden: (B, H); encoder_outputs: (S, B, H) (PyTorch layout); W: (H, 2H); b, v: (H,).
    Returns softmax attention weights of shape (B, 1, S), float32."""
    S, B, H = encoder_outputs.shape
    if hidden.shape != (B, H):
        raise ValueError(f"hidden must be ({B},{H}), got {hidden.shape}")
    if B > 1 and H % 128 != 0:
        # TODO(synk): zero-pad H (and W/b/v accordingly) to a multiple of 128 so the
        # per-batch (seq_tile, H) encoder block stays lane-aligned when B > 1.
        raise ValueError("attn_forward requires H % 128 == 0 when B > 1")
    if tanh_dtype is None:
        tanh_dtype = jnp.float32

    # Hoisted hidden-side projection (runs once, tiny):
    #   cat([h, e]) @ W.T == (h @ W1.T + b) + e @ W2.T
    # so the batch-only half never enters the per-sequence-tile loop.
    w1t = W[:, :H].T
    w2t = W[:, H:].T
    hw = (jnp.dot(hidden, w1t, preferred_element_type=jnp.float32)
          + b.astype(jnp.float32))                                             # (B, H) f32
    v2 = v.reshape(1, H)

    # (S, B, H) -> (S, B*H) is a free contiguous reshape; no HBM transpose pass.  The
    # BlockSpec column block [b*H, (b+1)*H) of every row is exactly batch b's (S, H) slab.
    enc2d = encoder_outputs.reshape(S, B * H)

    itemsize = jnp.dtype(encoder_outputs.dtype).itemsize
    vmem_budget = _vmem_budget_bytes()
    if seq_tile is None:
        seq_tile = _pick_seq_tile(S, H, itemsize, vmem_budget)
    seq_tile = min(int(seq_tile), S)
    if seq_tile != S and seq_tile % 128 != 0:
        raise ValueError("seq_tile must equal S or be a multiple of 128")
    n_s = pl.cdiv(S, seq_tile)
    S_pad = n_s * seq_tile      # ragged tail handled by masking scores to -inf

    # Scoped-VMEM limit: covers the chosen tiles; raised on 128 MiB parts, kept well
    # under v7x's 64 MiB by the budget above.
    est = ((2 * itemsize + 12) * H * seq_tile + H * H * itemsize
           + 16 * S_pad + (2 << 20))
    vmem_limit = int(min(100 << 20, max(vmem_budget, est)))

    kernel = functools.partial(attn_kernel, valid_s=S, tanh_dtype=tanh_dtype)

    out = pl.pallas_call(
        kernel,
        out_shape=jax.ShapeDtypeStruct((B, 1, S_pad), jnp.float32),
        grid=(B, n_s),
        in_specs=[
            pl.BlockSpec((B, H), lambda bb, ss: (0, 0)),              # hw     (resident)
            # If profiling shows the enc DMA exposed on v5e/v6e, pipeline_mode=
            # pl.Buffered(3) here is cheap insurance (skip on v7x: half the VMEM).
            pl.BlockSpec((seq_tile, H), lambda bb, ss: (ss, bb)),     # enc    (pipelined)
            pl.BlockSpec((H, H), lambda bb, ss: (0, 0)),              # W2.T   (resident)
            pl.BlockSpec((1, H), lambda bb, ss: (0, 0)),              # v      (resident)
        ],
        out_specs=pl.BlockSpec((1, 1, S_pad), lambda bb, ss: (bb, 0, 0)),
        scratch_shapes=[pltpu.VMEM((1, S_pad), jnp.float32)],
        compiler_params=pltpu.CompilerParams(
            # Batch axis is "parallel" (megacore split on v7x; keep B even there).
            # TODO(synk): for B == 1 on v7x, split the sequence axis across the two
            # TensorCores with a small cross-core score combine before softmax.
            dimension_semantics=("parallel", "arbitrary"),
            vmem_limit_bytes=vmem_limit),
    )(hw, enc2d, w2t, v2)

    return out if S_pad == S else out[:, :, :S]


def attn_reference(hidden, encoder_outputs, W, b, v):
    """Pure-JAX mirror of the PyTorch forward, for verification (high-precision f32)."""
    S, B, H = encoder_outputs.shape
    h_rep = jnp.broadcast_to(hidden[:, None, :], (B, S, H))                    # (B, S, H)
    enc = jnp.transpose(encoder_outputs, (1, 0, 2))                            # (B, S, H)
    cat = jnp.concatenate([h_rep, enc], axis=2)                                # (B, S, 2H)
    energy = jnp.tanh(
        jnp.dot(cat, W.T, precision=jax.lax.Precision.HIGHEST) + b)            # (B, S, H)
    scores = jnp.einsum('bsh,h->bs', energy, v,
                        precision=jax.lax.Precision.HIGHEST)                   # (B, S)
    return jax.nn.softmax(scores, axis=-1)[:, None, :]                         # (B, 1, S)


if __name__ == "__main__":
    key = jax.random.PRNGKey(0)
    k_h, k_e, k_w, k_b, k_v, k_h2, k_e2 = jax.random.split(key, 7)

    # Lane/sublane-aligned shapes (H multiple of 128 so per-batch enc blocks are lane-dense).
    B, S, H = 4, 256, 128
    hidden = jax.random.normal(k_h, (B, H), dtype=jnp.float32)
    encoder_outputs = jax.random.normal(k_e, (S, B, H), dtype=jnp.float32)

    # Deterministic parameter init matching nn.Linear(2H, H) + v ~ N(0, 1/sqrt(H)).
    bound = 1.0 / math.sqrt(2 * H)
    W = jax.random.uniform(k_w, (H, 2 * H), minval=-bound, maxval=bound, dtype=jnp.float32)
    b = jax.random.uniform(k_b, (H,), minval=-bound, maxval=bound, dtype=jnp.float32)
    v = (1.0 / math.sqrt(H)) * jax.random.normal(k_v, (H,), dtype=jnp.float32)

    ref = attn_reference(hidden, encoder_outputs, W, b, v)

    # 1) f32, auto sequence tile (single tile at this size).
    out = jax.block_until_ready(attn_forward(hidden, encoder_outputs, W, b, v))
    assert out.shape == (B, 1, S), out.shape
    assert jnp.allclose(out, ref, atol=2e-3, rtol=2e-3), "f32 (auto tile) mismatch"

    # 2) f32, forced multi-tile over S (exercises the resident-scores / finalize path).
    out2 = jax.block_until_ready(
        attn_forward(hidden, encoder_outputs, W, b, v, seq_tile=128))
    assert jnp.allclose(out2, ref, atol=2e-3, rtol=2e-3), "f32 (seq_tile=128) mismatch"

    # 3) bf16 HBM operands: halves the dominant (S,B,H) DMA stream (biggest win on v5e);
    #    tanh / softmax stay f32.  Reference uses the same bf16-rounded inputs.
    bf = jnp.bfloat16
    hb, eb, Wb, bb_, vb = (x.astype(bf) for x in (hidden, encoder_outputs, W, b, v))
    ref_bf = attn_reference(*(x.astype(jnp.float32) for x in (hb, eb, Wb, bb_, vb)))
    out3 = jax.block_until_ready(attn_forward(hb, eb, Wb, bb_, vb))
    assert jnp.allclose(out3, ref_bf, atol=2e-3, rtol=2e-3), "bf16 mismatch"

    # 4) bf16 operands + bf16 tanh / bf16 v-dot (v6e/v7x option; keep f32 default on v5e).
    out4 = jax.block_until_ready(
        attn_forward(hb, eb, Wb, bb_, vb, tanh_dtype=jnp.bfloat16))
    assert jnp.allclose(out4, ref_bf, atol=8e-3, rtol=8e-3), "bf16-tanh mismatch"

    # 5) Ragged sequence length (S % 128 != 0): padded tail masked to -inf before softmax.
    S2, B2 = 200, 2
    hidden2 = jax.random.normal(k_h2, (B2, H), dtype=jnp.float32)
    enc2 = jax.random.normal(k_e2, (S2, B2, H), dtype=jnp.float32)
    ref2 = attn_reference(hidden2, enc2, W, b, v)
    out5 = jax.block_until_ready(attn_forward(hidden2, enc2, W, b, v, seq_tile=128))
    assert out5.shape == (B2, 1, S2), out5.shape
    assert jnp.allclose(out5, ref2, atol=2e-3, rtol=2e-3), "ragged-S mismatch"

    print("KERNEL_OK")
</pallas_src>

<mosaic_0001>
module attributes {stable_mosaic.version = 11 : i64} {
  func.func @attn_kernel(%arg0: i32, %arg1: i32, %arg2: memref<4x128xf32, #tpu.memory_space<vmem>>, %arg3: memref<256x128xf32, #tpu.memory_space<vmem>>, %arg4: memref<128x128xf32, #tpu.memory_space<vmem>>, %arg5: memref<1x128xf32, #tpu.memory_space<vmem>>, %arg6: memref<1x1x256xf32, #tpu.memory_space<vmem>>, %arg7: memref<1x256xf32, #tpu.memory_space<vmem>>) attributes {dimension_semantics = [#tpu.dimension_semantics<parallel>, #tpu.dimension_semantics<arbitrary>], iteration_bounds = array<i64: 4, 1>, scalar_prefetch = 0 : i64, scratch_operands = 1 : i64, tpu.core_type = #tpu.core_type<tc>, window_params = [{pipeline_mode = #tpu.pipeline_mode<synchronous>, transform_indices = @transform_0, window_bounds = array<i64: 4, 128>}, {transform_indices = @transform_1, window_bounds = array<i64: 256, 128>}, {pipeline_mode = #tpu.pipeline_mode<synchronous>, transform_indices = @transform_2, window_bounds = array<i64: 128, 128>}, {pipeline_mode = #tpu.pipeline_mode<synchronous>, transform_indices = @transform_3, window_bounds = array<i64: 1, 128>}, {transform_indices = @transform_4, window_bounds = array<i64: 1, 1, 256>}]} {
    %0 = arith.index_cast %arg0 : i32 to index
    %c0 = arith.constant 0 : index
    %1 = vector.load %arg2[%0, %c0] : memref<4x128xf32, #tpu.memory_space<vmem>>, vector<1x128xf32>
    %c0_0 = arith.constant 0 : index
    %c0_1 = arith.constant 0 : index
    %2 = vector.load %arg3[%c0_0, %c0_1] : memref<256x128xf32, #tpu.memory_space<vmem>>, vector<256x128xf32>
    %c0_2 = arith.constant 0 : index
    %c0_3 = arith.constant 0 : index
    %3 = vector.load %arg4[%c0_2, %c0_3] : memref<128x128xf32, #tpu.memory_space<vmem>>, vector<128x128xf32>
    %cst = arith.constant dense<0.000000e+00> : vector<256x128xf32>
    %4 = tpu.matmul %2, %3, %cst {dimension_numbers = #tpu.dot_dimension_numbers<[1], [0], [0], [1], [0, 0, 1, 1], [], []>} : vector<256x128xf32>, vector<128x128xf32>, vector<256x128xf32> -> vector<256x128xf32>
    %5 = vector.broadcast %1 : vector<1x128xf32> to vector<256x128xf32>
    %6 = arith.addf %4, %5 : vector<256x128xf32>
    %7 = math.tanh %6 : vector<256x128xf32>
    %c0_4 = arith.constant 0 : index
    %c0_5 = arith.constant 0 : index
    %8 = vector.load %arg5[%c0_4, %c0_5] : memref<1x128xf32, #tpu.memory_space<vmem>>, vector<1x128xf32>
    %cst_6 = arith.constant dense<0.000000e+00> : vector<1x256xf32>
    %9 = tpu.matmul %8, %7, %cst_6 {dimension_numbers = #tpu.dot_dimension_numbers<[1], [1], [0], [0], [0, 0, 1, 0], [], []>} : vector<1x128xf32>, vector<256x128xf32>, vector<1x256xf32> -> vector<1x256xf32>
    %c256_i32 = arith.constant 256 : i32
    %10 = arith.muli %arg1, %c256_i32 : i32
    %11 = tpu.assume_multiple %10, 256 : i32
    %c0_7 = arith.constant 0 : index
    %12 = arith.index_cast %11 : i32 to index
    %13 = vector.load %arg7[%c0_7, %12] : memref<1x256xf32, #tpu.memory_space<vmem>>, vector<1x256xf32>
    tpu.vector_store %arg7[%c0_7, %12], %9 {strides = array<i32>} : memref<1x256xf32, #tpu.memory_space<vmem>>, vector<1x256xf32>,
    %c0_i32 = arith.constant 0 : i32
    %14 = arith.cmpi eq, %arg1, %c0_i32 : i32
    %15 = arith.extui %14 : i1 to i32
    %c0_i32_8 = arith.constant 0 : i32
    %16 = arith.cmpi ne, %15, %c0_i32_8 : i32
    scf.if %16 {
      %c0_9 = arith.constant 0 : index
      %c0_10 = arith.constant 0 : index
      %17 = vector.load %arg7[%c0_9, %c0_10] : memref<1x256xf32, #tpu.memory_space<vmem>>, vector<1x256xf32>
      %cst_11 = arith.constant dense<0xFF800000> : vector<1xf32>
      %18 = vector.multi_reduction <maximumf>, %17, %cst_11 [1] : vector<1x256xf32> to vector<1xf32>
      %19 = vector.shape_cast %18 : vector<1xf32> to vector<1x1xf32>
      %20 = vector.broadcast %19 : vector<1x1xf32> to vector<1x256xf32>
      %21 = arith.subf %17, %20 : vector<1x256xf32>
      %22 = math.exp %21 : vector<1x256xf32>
      %cst_12 = arith.constant dense<0.000000e+00> : vector<1xf32>
      %23 = vector.multi_reduction <add>, %22, %cst_12 [1] : vector<1x256xf32> to vector<1xf32>
      %24 = vector.shape_cast %23 : vector<1xf32> to vector<1x1xf32>
      %25 = tpu.reciprocal %24 {approx = true} : vector<1x1xf32> -> vector<1x1xf32>
      %26 = vector.broadcast %25 : vector<1x1xf32> to vector<1x256xf32>
      %27 = arith.mulf %22, %26 : vector<1x256xf32>
      %28 = vector.shape_cast %27 : vector<1x256xf32> to vector<1x1x256xf32>
      %c0_13 = arith.constant 0 : index
      %c0_14 = arith.constant 0 : index
      %c0_15 = arith.constant 0 : index
      %29 = vector.load %arg6[%c0_13, %c0_14, %c0_15] : memref<1x1x256xf32, #tpu.memory_space<vmem>>, vector<1x1x256xf32>
      tpu.vector_store %arg6[%c0_13, %c0_14, %c0_15], %28 {strides = array<i32>} : memref<1x1x256xf32, #tpu.memory_space<vmem>>, vector<1x1x256xf32>,
    } else {
    }
    return
  }
  func.func @transform_0(%arg0: i32, %arg1: i32) -> (i32, i32) {
    %c0_i32 = arith.constant 0 : i32
    %c0_i32_0 = arith.constant 0 : i32
    %c0_i32_1 = arith.constant 0 : i32
    return %c0_i32, %c0_i32_0 : i32, i32
  }
  func.func @transform_1(%arg0: i32, %arg1: i32) -> (i32, i32) {
    %c0_i32 = arith.constant 0 : i32
    return %arg1, %arg0 : i32, i32
  }
  func.func @transform_2(%arg0: i32, %arg1: i32) -> (i32, i32) {
    %c0_i32 = arith.constant 0 : i32
    %c0_i32_0 = arith.constant 0 : i32
    %c0_i32_1 = arith.constant 0 : i32
    return %c0_i32, %c0_i32_0 : i32, i32
  }
  func.func @transform_3(%arg0: i32, %arg1: i32) -> (i32, i32) {
    %c0_i32 = arith.constant 0 : i32
    %c0_i32_0 = arith.constant 0 : i32
    %c0_i32_1 = arith.constant 0 : i32
    return %c0_i32, %c0_i32_0 : i32, i32
  }
  func.func @transform_4(%arg0: i32, %arg1: i32) -> (i32, i32, i32) {
    %c0_i32 = arith.constant 0 : i32
    %c0_i32_0 = arith.constant 0 : i32
    %c0_i32_1 = arith.constant 0 : i32
    return %arg0, %c0_i32, %c0_i32_0 : i32, i32, i32
  }
}

</mosaic_0001>

<llo_original>
// kernel: tpu_custom_call.1
$region0: #{tpu_custom_call.1}
  #allocation0 [shape = 'u32[]', space=smem, size = 0x4, offset = 0x4, fixed_abs, tag = 'smem constant byte address 0x4 - core index']
  #allocation1 [shape = 'u32[72,128]{1,0:T(1,128)}', space=vmem, size = 0x9000, scoped, tag = 'internal scratch']
  #allocation2 [shape = 'f32[1,256]{1,0:T(1,128)}', space=vmem, size = 0x400, scoped, tag = 'scratch operand']
  %s0 = inlined_call_operand.hbm [shape: f32[4,128], index: 0, kind: input, shape index: {}]
  %s1 = inlined_call_operand.hbm [shape: f32[256,512], index: 1, kind: input, shape index: {}]
  %s2 = inlined_call_operand.hbm [shape: f32[128,128], index: 2, kind: input, shape index: {}]
  %s3 = inlined_call_operand.vmem [shape: f32[1,128], index: 3, kind: input, shape index: {}]
  %s4 = inlined_call_operand.hbm [shape: f32[4,1,256], index: 4, kind: output, shape index: {}]
  %s5 = sld [smem:[#allocation0]]
  $region65: #{tpu_custom_call.1} parent=0
    _
  %s7 = ssub.s32 1, %s5
  %s8 = scalar_select 0, %s7, %s5
  $region1: #{tpu_custom_call.1} parent=0
    #allocation3 [shape = 'u8[2048]{0}', space=vmem, size = 0x800, scoped, tag = 'input window, operand 0, single buffered']
    #allocation4 [shape = 's32[2]{0}', space=sflag, size = 0x8, scoped, tag = 'scoped memory for tpu_custom_call.1']
    #allocation5 [shape = 's32[2]{0}', space=sflag, size = 0x8, scoped, tag = 'scoped memory for tpu_custom_call.1']
    #allocation6 [shape = 'u8[262144]{0}', space=vmem, size = 0x40000, scoped, tag = 'input window, operand 1']
    #allocation7 [shape = 's32[2]{0}', space=sflag, size = 0x8, scoped, tag = 'scoped memory for tpu_custom_call.1']
    #allocation8 [shape = 'u8[65536]{0}', space=vmem, size = 0x10000, scoped, tag = 'input window, operand 2, single buffered']
    #allocation9 [shape = 'u8[2048]{0}', space=vmem, size = 0x800, scoped, tag = 'output window, operand 0']
    %9 = vsyncpa [#allocation4], 0
    %10 = vsyncpa [#allocation7], 0
    %s11 = scalar_lea.sflag [#allocation7], 1
    %12 = vsyncpa %s11, 0
    %13 = vsyncpa [#allocation5], 0
    %s14 = scalar_lea.sflag [#allocation5], 1
    %15 = vsyncpa %s14, 0
    loop: start=0, step=1, limit=6
    $region2: #{tpu_custom_call.1} parent=1 // loop_pre_header
      _
    $region3: #{tpu_custom_call.1} parent=1 // loop_header
      %s17 = sphi 0, %s21
      %p18 = scmp.ge.s32.totalorder %s17, 6
      %s24 = sphi 0, %s36
      %s25 = sphi 0, %s32
      %s26 = sphi 0, %s24
      %s27 = sphi 0, %s25
      %s28 = sphi 0, %s26
      %s29 = sphi 0, %s27
      %s37 = sphi 0, %s37
      %s39 = sphi 0, %s37
      %s40 = sphi 0, %s39
      %s54 = sphi 0, %s40
      %s62 = sphi 0, %s64
      %s65 = sphi 0, %s62
      %s66 = sphi 0, %s65
      %s82 = sphi 0, %s66
      %s86 = sphi 0, %s86
      %s88 = sphi 0, %s86
      %s89 = sphi 0, %s88
      %s103 = sphi 0, %s89
      %s107 = sphi 0, %s107
      %s109 = sphi 0, %s107
      %s110 = sphi 0, %s109
      %s124 = sphi 0, %s110
      %s130 = sphi 0, %s132
      %s133 = sphi 0, %s130
      %s134 = sphi 0, %s133
      %s150 = sphi 0, %s134
    $region4: #{tpu_custom_call.1} parent=1 // loop_header_branch
      %20 = sbr.rel (%p18) target = $region8
    $region5: #{tpu_custom_call.1} parent=1 // loop_body
      %s22 = ssub.s32 %s17, 1
      %s23 = ssub.s32 %s17, 2
      %s30 = sadd.s32 1, %s25
      %p31 = scmp.ge.s32.totalorder %s30, 1
      %s32 = scalar_select %p31, 0, %s30
      %s33 = sadd.s32 1, %s24
      %s34 = scalar_select %p31, %s33, %s24
      %p35 = scmp.ge.s32.totalorder %s34, 4
      %s36 = scalar_select %p35, 0, %s34
      %s38 = sadd.s32 %s37, 1
      %p41 = scmp.eq.s32.totalorder %s17, 3
      %p42 = scmp.ne.s32.totalorder %s37, %s39
      %p43 = scmp.eq.s32.totalorder %s17, 0
      %p44 = por %p42, %p43
      %p45 = scmp.ne.s32.totalorder %s37, %s39
      %p46 = scmp.eq.s32.totalorder %s22, 3
      %p47 = por %p45, %p46
      %p48 = scmp.ne.s32.totalorder %s39, %s40
      %p49 = scmp.eq.s32.totalorder %s22, 0
      %p50 = por %p48, %p49
      %p51 = scmp.ne.s32.totalorder %s39, %s40
      %p52 = scmp.eq.s32.totalorder %s23, 3
      %p53 = por %p51, %p52
      %p55 = scmp.ne.s32.totalorder %s40, %s54
      %p56 = scmp.eq.s32.totalorder %s23, 0
      %p57 = por %p55, %p56
      %s58 = ssub.s32 %s25, %s32
      %s59 = ssub.s32 %s24, %s36
      %s60 = sor.u32 %s58, %s59
      %p61 = scmp.eq.s32.totalorder %s60, 0
      %s63 = sadd.s32 %s62, 1
      %s64 = scalar_select %p61, %s62, %s63
      %p67 = pneg %p61
      %p68 = scmp.eq.s32.totalorder %s17, 3
      %p69 = por %p67, %p68
      %p70 = scmp.ne.s32.totalorder %s62, %s65
      %p71 = scmp.eq.s32.totalorder %s17, 0
      %p72 = por %p70, %p71
      %p73 = scmp.ne.s32.totalorder %s62, %s65
      %p74 = scmp.eq.s32.totalorder %s22, 3
      %p75 = por %p73, %p74
      %p76 = scmp.ne.s32.totalorder %s65, %s66
      %p77 = scmp.eq.s32.totalorder %s22, 0
      %p78 = por %p76, %p77
      %p79 = scmp.ne.s32.totalorder %s65, %s66
      %p80 = scmp.eq.s32.totalorder %s23, 3
      %p81 = por %p79, %p80
      %p83 = scmp.ne.s32.totalorder %s66, %s82
      %p84 = scmp.eq.s32.totalorder %s23, 0
      %p85 = por %p83, %p84
      %s87 = sadd.s32 %s86, 1
      %p90 = scmp.eq.s32.totalorder %s17, 3
      %p91 = scmp.ne.s32.totalorder %s86, %s88
      %p92 = scmp.eq.s32.totalorder %s17, 0
      %p93 = por %p91, %p92
      %p94 = scmp.ne.s32.totalorder %s86, %s88
      %p95 = scmp.eq.s32.totalorder %s22, 3
      %p96 = por %p94, %p95
      %p97 = scmp.ne.s32.totalorder %s88, %s89
      %p98 = scmp.eq.s32.totalorder %s22, 0
      %p99 = por %p97, %p98
      %p100 = scmp.ne.s32.totalorder %s88, %s89
      %p101 = scmp.eq.s32.totalorder %s23, 3
      %p102 = por %p100, %p101
      %p104 = scmp.ne.s32.totalorder %s89, %s103
      %p105 = scmp.eq.s32.totalorder %s23, 0
      %p106 = por %p104, %p105
      %s108 = sadd.s32 %s107, 1
      %p111 = scmp.eq.s32.totalorder %s17, 3
      %p112 = scmp.ne.s32.totalorder %s107, %s109
      %p113 = scmp.eq.s32.totalorder %s17, 0
      %p114 = por %p112, %p113
      %p115 = scmp.ne.s32.totalorder %s107, %s109
      %p116 = scmp.eq.s32.totalorder %s22, 3
      %p117 = por %p115, %p116
      %p118 = scmp.ne.s32.totalorder %s109, %s110
      %p119 = scmp.eq.s32.totalorder %s22, 0
      %p120 = por %p118, %p119
      %p121 = scmp.ne.s32.totalorder %s109, %s110
      %p122 = scmp.eq.s32.totalorder %s23, 3
      %p123 = por %p121, %p122
      %p125 = scmp.ne.s32.totalorder %s110, %s124
      %p126 = scmp.eq.s32.totalorder %s23, 0
      %p127 = por %p125, %p126
      %s128 = ssub.s32 %s24, %s36
      %p129 = scmp.eq.s32.totalorder %s128, 0
      %s131 = sadd.s32 %s130, 1
      %s132 = scalar_select %p129, %s130, %s131
      %p135 = pneg %p129
      %p136 = scmp.eq.s32.totalorder %s17, 3
      %p137 = por %p135, %p136
      %p138 = scmp.ne.s32.totalorder %s130, %s133
      %p139 = scmp.eq.s32.totalorder %s17, 0
      %p140 = por %p138, %p139
      %p141 = scmp.ne.s32.totalorder %s130, %s133
      %p142 = scmp.eq.s32.totalorder %s22, 3
      %p143 = por %p141, %p142
      %p144 = scmp.ne.s32.totalorder %s133, %s134
      %p145 = scmp.eq.s32.totalorder %s22, 0
      %p146 = por %p144, %p145
      %p147 = scmp.ne.s32.totalorder %s133, %s134
      %p148 = scmp.eq.s32.totalorder %s23, 3
      %p149 = por %p147, %p148
      %p151 = scmp.ne.s32.totalorder %s134, %s150
      %p152 = scmp.eq.s32.totalorder %s23, 0
      %p153 = por %p151, %p152
      %p154 = scmp.le.s32.totalorder 1, %s17
      %p155 = scmp.lt.s32.totalorder %s17, 5
      %p156 = pnand %p154, %p155
      %p157 = pneg %p156
      // Predicated region
      $region9: #{tpu_custom_call.1} parent=5 // pred_check
        _
      $region10: #{tpu_custom_call.1} parent=5 // pred_check_branch
        %159 = sbr.rel (%p156) target = $region12
      $region11: #{tpu_custom_call.1} parent=5 // pred_region
        %s160 = ssub.s32 %s17, 1
        // Predicated region
        $region13: #{tpu_custom_call.1} parent=11 // pred_check
          %p161 = pneg %p50
        $region14: #{tpu_custom_call.1} parent=11 // pred_check_branch
          %163 = sbr.rel (%p161) target = $region16
        $region15: #{tpu_custom_call.1} parent=11 // pred_region
          %165 = vsyncadd [#allocation4], 0
          %s167 = sshll.u32 %s0, 4
          %s168 = int_to_ptr.hbm [resolvable:$true] %s167
          %s169 = sshll.u32 [#allocation3], 4
          %s170 = int_to_ptr.vmem [resolvable:$true] %s169
          %172 = dma.hbm_to_vmem [thread:$0]  %s168, 64, %s170, [#allocation4]
        $region16: #{tpu_custom_call.1} parent=11 // pred_fallthru
          _
        // Predicated region
        $region17: #{tpu_custom_call.1} parent=11 // pred_check
          %p173 = pneg %p99
        $region18: #{tpu_custom_call.1} parent=11 // pred_check_branch
          %175 = sbr.rel (%p173) target = $region20
        $region19: #{tpu_custom_call.1} parent=11 // pred_region
          %177 = vsyncadd [#allocation7], 0
          %s178 = sshll.u32 %s2, 4
          %s179 = int_to_ptr.hbm [resolvable:$true] %s178
          %s180 = sshll.u32 [#allocation8], 4
          %s181 = int_to_ptr.vmem [resolvable:$true] %s180
          %186 = dma.hbm_to_vmem [thread:$0]  %s179, 2048, %s181, [#allocation7], 128, 128, 8
        $region20: #{tpu_custom_call.1} parent=11 // pred_fallthru
          _
        // Predicated region
        $region21: #{tpu_custom_call.1} parent=11 // pred_check
          %p187 = pneg %p120
        $region22: #{tpu_custom_call.1} parent=11 // pred_check_branch
          %189 = sbr.rel (%p187) target = $region24
        $region23: #{tpu_custom_call.1} parent=11 // pred_region
          _
        $region24: #{tpu_custom_call.1} parent=11 // pred_fallthru
          _
      $region12: #{tpu_custom_call.1} parent=5 // pred_fallthru
        _
      %p190 = scmp.lt.s32.totalorder %s17, 4
      // Predicated region
      $region25: #{tpu_custom_call.1} parent=5 // pred_check
        %p191 = pneg %p190
      $region26: #{tpu_custom_call.1} parent=5 // pred_check_branch
        %193 = sbr.rel (%p191) target = $region28
      $region27: #{tpu_custom_call.1} parent=5 // pred_region
        // Predicated region
        $region29: #{tpu_custom_call.1} parent=27 // pred_check
          %p194 = pneg %p72
        $region30: #{tpu_custom_call.1} parent=27 // pred_check_branch
          %196 = sbr.rel (%p194) target = $region32
        $region31: #{tpu_custom_call.1} parent=27 // pred_region
          %s197 = sand.u32 %s17, 1
          %s198 = scalar_lea.sflag [#allocation7], %s197
          %s199 = sand.u32 %s62, 1
          %s200 = smul.addr %s199, 256
          %s201 = scalar_lea.vmem [#allocation6], %s200
          %s202 = smul.u32 32, %s25
          %204 = vsyncadd %s198, 0
          %s205 = smul.addr %s202, 4
          %s206 = sadd.s32 %s24, %s205
          %s207 = smul.addr %s206, 8
          %s208 = scalar_lea.hbm %s1, %s207
          %s209 = sshll.u32 %s208, 4
          %s210 = int_to_ptr.hbm [resolvable:$true] %s209
          %s211 = sshll.u32 %s201, 4
          %s212 = int_to_ptr.vmem [resolvable:$true] %s211
          %217 = dma.hbm_to_vmem [thread:$0]  %s210, 4096, %s212, %s198, 512, 128, 8
        $region32: #{tpu_custom_call.1} parent=27 // pred_fallthru
          _
      $region28: #{tpu_custom_call.1} parent=5 // pred_fallthru
        _
      %p218 = scmp.le.s32.totalorder 1, %s17
      %p219 = scmp.lt.s32.totalorder %s17, 5
      %p220 = pnand %p218, %p219
      %p221 = pneg %p220
      // Predicated region
      $region33: #{tpu_custom_call.1} parent=5 // pred_check
        _
      $region34: #{tpu_custom_call.1} parent=5 // pred_check_branch
        %223 = sbr.rel (%p220) target = $region36
      $region35: #{tpu_custom_call.1} parent=5 // pred_region
        %s224 = ssub.s32 %s17, 1
        // Predicated region
        $region37: #{tpu_custom_call.1} parent=35 // pred_check
          %p225 = pneg %p50
        $region38: #{tpu_custom_call.1} parent=35 // pred_check_branch
          %227 = sbr.rel (%p225) target = $region40
        $region39: #{tpu_custom_call.1} parent=35 // pred_region
          %229 = dma.done [#allocation4], 64
        $region40: #{tpu_custom_call.1} parent=35 // pred_fallthru
          _
        %s230 = sand.u32 %s22, 1
        %s231 = scalar_lea.sflag [#allocation7], %s230
        %s232 = sand.u32 %s65, 1
        %s233 = smul.addr %s232, 256
        %s234 = scalar_lea.vmem [#allocation6], %s233
        // Predicated region
        $region41: #{tpu_custom_call.1} parent=35 // pred_check
          %p235 = pneg %p78
        $region42: #{tpu_custom_call.1} parent=35 // pred_check_branch
          %237 = sbr.rel (%p235) target = $region44
        $region43: #{tpu_custom_call.1} parent=35 // pred_region
          %239 = dma.done %s231, 4096
        $region44: #{tpu_custom_call.1} parent=35 // pred_fallthru
          _
        // Predicated region
        $region45: #{tpu_custom_call.1} parent=35 // pred_check
          %p240 = pneg %p99
        $region46: #{tpu_custom_call.1} parent=35 // pred_check_branch
          %242 = sbr.rel (%p240) target = $region48
        $region47: #{tpu_custom_call.1} parent=35 // pred_region
          %244 = dma.done [#allocation7], 2048
        $region48: #{tpu_custom_call.1} parent=35 // pred_fallthru
          _
        %p245 = pneg %p50
        %p246 = pneg %p47
        %s247 = sand.u32 %s22, 1
        %s248 = scalar_lea.sflag [#allocation7], %s247
        %s249 = sand.u32 %s65, 1
        %s250 = smul.addr %s249, 256
        %s251 = scalar_lea.vmem [#allocation6], %s250
        %p252 = pneg %p78
        %p253 = pneg %p75
        %p254 = pneg %p99
        %p255 = pneg %p96
        %p256 = pneg %p120
        %p257 = pneg %p117
        %p258 = pneg %p146
        %p259 = pneg %p143
        %s260 = sand.u32 %s133, 1
        %s261 = scalar_lea.sflag [#allocation5], %s260
        %s262 = sand.u32 %s133, 1
        %s263 = smul.addr %s262, 2
        %s264 = scalar_lea.vmem [#allocation9], %s263
        %s265 = smul.u32 32, %s27
        %s266 = scalar_lea.vmem [#allocation3], %s26
        %v267 = vld [vmem:[%s266] sm:$0x1]
        %v268 = vld [vmem:[%s234] sm:$0xff]
        %v269 = vld [vmem:[%s234 + $0x8] sm:$0xff]
        %v270 = vld [vmem:[%s234 + $0x10] sm:$0xff]
        %v271 = vld [vmem:[%s234 + $0x18] sm:$0xff]
        %v272 = vld [vmem:[%s234 + $0x20] sm:$0xff]
        %v273 = vld [vmem:[%s234 + $0x28] sm:$0xff]
        %v274 = vld [vmem:[%s234 + $0x30] sm:$0xff]
        %v275 = vld [vmem:[%s234 + $0x38] sm:$0xff]
        %v276 = vld [vmem:[%s234 + $0x40] sm:$0xff]
        %v277 = vld [vmem:[%s234 + $0x48] sm:$0xff]
        %v278 = vld [vmem:[%s234 + $0x50] sm:$0xff]
        %v279 = vld [vmem:[%s234 + $0x58] sm:$0xff]
        %v280 = vld [vmem:[%s234 + $0x60] sm:$0xff]
        %v281 = vld [vmem:[%s234 + $0x68] sm:$0xff]
        %v282 = vld [vmem:[%s234 + $0x70] sm:$0xff]
        %v283 = vld [vmem:[%s234 + $0x78] sm:$0xff]
        %v284 = vld [vmem:[%s234 + $0x80] sm:$0xff]
        %v285 = vld [vmem:[%s234 + $0x88] sm:$0xff]
        %v286 = vld [vmem:[%s234 + $0x90] sm:$0xff]
        %v287 = vld [vmem:[%s234 + $0x98] sm:$0xff]
        %v288 = vld [vmem:[%s234 + $0xa0] sm:$0xff]
        %v289 = vld [vmem:[%s234 + $0xa8] sm:$0xff]
        %v290 = vld [vmem:[%s234 + $0xb0] sm:$0xff]
        %v291 = vld [vmem:[%s234 + $0xb8] sm:$0xff]
        %v292 = vld [vmem:[%s234 + $0xc0] sm:$0xff]
        %v293 = vld [vmem:[%s234 + $0xc8] sm:$0xff]
        %v294 = vld [vmem:[%s234 + $0xd0] sm:$0xff]
        %v295 = vld [vmem:[%s234 + $0xd8] sm:$0xff]
        %v296 = vld [vmem:[%s234 + $0xe0] sm:$0xff]
        %v297 = vld [vmem:[%s234 + $0xe8] sm:$0xff]
        %v298 = vld [vmem:[%s234 + $0xf0] sm:$0xff]
        %v299 = vld [vmem:[%s234 + $0xf8] sm:$0xff]
        %v300 = vld [vmem:[#allocation8] sm:$0xff]
        %v301 = vld [vmem:[#allocation8 + $0x8] sm:$0xff]
        %v302 = vld [vmem:[#allocation8 + $0x10] sm:$0xff]
        %v303 = vld [vmem:[#allocation8 + $0x18] sm:$0xff]
        %v304 = vld [vmem:[#allocation8 + $0x20] sm:$0xff]
        %v305 = vld [vmem:[#allocation8 + $0x28] sm:$0xff]
        %v306 = vld [vmem:[#allocation8 + $0x30] sm:$0xff]
        %v307 = vld [vmem:[#allocation8 + $0x38] sm:$0xff]
        %v308 = vld [vmem:[#allocation8 + $0x40] sm:$0xff]
        %v309 = vld [vmem:[#allocation8 + $0x48] sm:$0xff]
        %v310 = vld [vmem:[#allocation8 + $0x50] sm:$0xff]
        %v311 = vld [vmem:[#allocation8 + $0x58] sm:$0xff]
        %v312 = vld [vmem:[#allocation8 + $0x60] sm:$0xff]
        %v313 = vld [vmem:[#allocation8 + $0x68] sm:$0xff]
        %v314 = vld [vmem:[#allocation8 + $0x70] sm:$0xff]
        %v315 = vld [vmem:[#allocation8 + $0x78] sm:$0xff]
        %v316 = vperm.slane %v267, 0
        %317 = vmatpush.msra.mxu0 %v315
        %318 = vmatpush.msra.mxu0 %v314
        %319 = vmatpush.msra.mxu0 %v313
        %320 = vmatpush.msra.mxu0 %v312
        %321 = vmatpush.msra.mxu0 %v311
        %322 = vmatpush.msra.mxu0 %v310
        %323 = vmatpush.msra.mxu0 %v309
        %324 = vmatpush.msra.mxu0 %v308
        %325 = vmatpush.msra.mxu0 %v307
        %326 = vmatpush.msra.mxu0 %v306
        %327 = vmatpush.msra.mxu0 %v305
        %328 = vmatpush.msra.mxu0 %v304
        %329 = vmatpush.msra.mxu0 %v303
        %330 = vmatpush.msra.mxu0 %v302
        %331 = vmatpush.msra.mxu0 %v301
        %332 = vmatpush.msra.mxu0 %v300
        %333 = vmatmul.f32.gmra.mxu0 %v268
        %v334 = vpop.f32.mrf.mxu0
        %v335 = vadd.f32 %v316, %v334
        %336 = vmatmul.f32.gmra.mxu0 %v269
        %v337 = vpop.f32.mrf.mxu0
        %v338 = vadd.f32 %v316, %v337
        %339 = vmatmul.f32.gmra.mxu0 %v270
        %v340 = vpop.f32.mrf.mxu0
        %v341 = vadd.f32 %v316, %v340
        %342 = vmatmul.f32.gmra.mxu0 %v271
        %v343 = vpop.f32.mrf.mxu0
        %v344 = vadd.f32 %v316, %v343
        %345 = vmatmul.f32.gmra.mxu0 %v272
        %v346 = vpop.f32.mrf.mxu0
        %v347 = vadd.f32 %v316, %v346
        %348 = vmatmul.f32.gmra.mxu0 %v273
        %v349 = vpop.f32.mrf.mxu0
        %v350 = vadd.f32 %v316, %v349
        %351 = vmatmul.f32.gmra.mxu0 %v274
        %v352 = vpop.f32.mrf.mxu0
        %v353 = vadd.f32 %v316, %v352
        %354 = vmatmul.f32.gmra.mxu0 %v275
        %v355 = vpop.f32.mrf.mxu0
        %v356 = vadd.f32 %v316, %v355
        %357 = vmatmul.f32.gmra.mxu0 %v276
        %v358 = vpop.f32.mrf.mxu0
        %v359 = vadd.f32 %v316, %v358
        %360 = vmatmul.f32.gmra.mxu0 %v277
        %v361 = vpop.f32.mrf.mxu0
        %v362 = vadd.f32 %v316, %v361
        %363 = vmatmul.f32.gmra.mxu0 %v278
        %v364 = vpop.f32.mrf.mxu0
        %v365 = vadd.f32 %v316, %v364
        %366 = vmatmul.f32.gmra.mxu0 %v279
        %v367 = vpop.f32.mrf.mxu0
        %v368 = vadd.f32 %v316, %v367
        %369 = vmatmul.f32.gmra.mxu0 %v280
        %v370 = vpop.f32.mrf.mxu0
        %v371 = vadd.f32 %v316, %v370
        %372 = vmatmul.f32.gmra.mxu0 %v281
        %v373 = vpop.f32.mrf.mxu0
        %v374 = vadd.f32 %v316, %v373
        %375 = vmatmul.f32.gmra.mxu0 %v282
        %v376 = vpop.f32.mrf.mxu0
        %v377 = vadd.f32 %v316, %v376
        %378 = vmatmul.f32.gmra.mxu0 %v283
        %v379 = vpop.f32.mrf.mxu0
        %v380 = vadd.f32 %v316, %v379
        %381 = vmatmul.f32.gmra.mxu0 %v284
        %v382 = vpop.f32.mrf.mxu0
        %v383 = vadd.f32 %v316, %v382
        %384 = vmatmul.f32.gmra.mxu0 %v285
        %v385 = vpop.f32.mrf.mxu0
        %v386 = vadd.f32 %v316, %v385
        %387 = vmatmul.f32.gmra.mxu0 %v286
        %v388 = vpop.f32.mrf.mxu0
        %v389 = vadd.f32 %v316, %v388
        %390 = vmatmul.f32.gmra.mxu0 %v287
        %v391 = vpop.f32.mrf.mxu0
        %v392 = vadd.f32 %v316, %v391
        %393 = vmatmul.f32.gmra.mxu0 %v288
        %v394 = vpop.f32.mrf.mxu0
        %v395 = vadd.f32 %v316, %v394
        %396 = vmatmul.f32.gmra.mxu0 %v289
        %v397 = vpop.f32.mrf.mxu0
        %v398 = vadd.f32 %v316, %v397
        %399 = vmatmul.f32.gmra.mxu0 %v290
        %v400 = vpop.f32.mrf.mxu0
        %v401 = vadd.f32 %v316, %v400
        %402 = vmatmul.f32.gmra.mxu0 %v291
        %v403 = vpop.f32.mrf.mxu0
        %v404 = vadd.f32 %v316, %v403
        %405 = vmatmul.f32.gmra.mxu0 %v292
        %v406 = vpop.f32.mrf.mxu0
        %v407 = vadd.f32 %v316, %v406
        %408 = vmatmul.f32.gmra.mxu0 %v293
        %v409 = vpop.f32.mrf.mxu0
        %v410 = vadd.f32 %v316, %v409
        %411 = vmatmul.f32.gmra.mxu0 %v294
        %v412 = vpop.f32.mrf.mxu0
        %v413 = vadd.f32 %v316, %v412
        %414 = vmatmul.f32.gmra.mxu0 %v295
        %v415 = vpop.f32.mrf.mxu0
        %v416 = vadd.f32 %v316, %v415
        %417 = vmatmul.f32.gmra.mxu0 %v296
        %v418 = vpop.f32.mrf.mxu0
        %v419 = vadd.f32 %v316, %v418
        %420 = vmatmul.f32.gmra.mxu0 %v297
        %v421 = vpop.f32.mrf.mxu0
        %v422 = vadd.f32 %v316, %v421
        %423 = vmatmul.f32.gmra.mxu0 %v298
        %v424 = vpop.f32.mrf.mxu0
        %v425 = vadd.f32 %v316, %v424
        %426 = vmatmul.f32.gmra.mxu0 %v299
        %v427 = vpop.f32.mrf.mxu0
        %v428 = vadd.f32 %v316, %v427
        %429 = vdwg.mxu0
        %v430 = vtanh.pop %v335
        %v431 = vtanh.pop %v338
        %v432 = vtanh.pop %v341
        %v433 = vtanh.pop %v344
        %v434 = vtanh.pop %v347
        %v435 = vtanh.pop %v350
        %v436 = vtanh.pop %v353
        %v437 = vtanh.pop %v356
        %v438 = vtanh.pop %v359
        %v439 = vtanh.pop %v362
        %v440 = vtanh.pop %v365
        %v441 = vtanh.pop %v368
        %v442 = vtanh.pop %v371
        %v443 = vtanh.pop %v374
        %v444 = vtanh.pop %v377
        %v445 = vtanh.pop %v380
        %v446 = vtanh.pop %v383
        %v447 = vtanh.pop %v386
        %v448 = vtanh.pop %v389
        %v449 = vtanh.pop %v392
        %v450 = vtanh.pop %v395
        %v451 = vtanh.pop %v398
        %v452 = vtanh.pop %v401
        %v453 = vtanh.pop %v404
        %v454 = vtanh.pop %v407
        %v455 = vtanh.pop %v410
        %v456 = vtanh.pop %v413
        %v457 = vtanh.pop %v416
        %v458 = vtanh.pop %v419
        %v459 = vtanh.pop %v422
        %v460 = vtanh.pop %v425
        %v461 = vtanh.pop %v428
        %v462 = vld [vmem:[%s3] sm:$0x1]
        %463 = vmatpush.xpose.msra.mxu0 %v445
        %464 = vmatpush.xpose.msra.mxu0 %v444
        %465 = vmatpush.xpose.msra.mxu0 %v443
        %466 = vmatpush.xpose.msra.mxu0 %v442
        %467 = vmatpush.xpose.msra.mxu0 %v441
        %468 = vmatpush.xpose.msra.mxu0 %v440
        %469 = vmatpush.xpose.msra.mxu0 %v439
        %470 = vmatpush.xpose.msra.mxu0 %v438
        %471 = vmatpush.xpose.msra.mxu0 %v437
        %472 = vmatpush.xpose.msra.mxu0 %v436
        %473 = vmatpush.xpose.msra.mxu0 %v435
        %474 = vmatpush.xpose.msra.mxu0 %v434
        %475 = vmatpush.xpose.msra.mxu0 %v433
        %476 = vmatpush.xpose.msra.mxu0 %v432
        %477 = vmatpush.xpose.msra.mxu0 %v431
        %478 = vmatpush.xpose.msra.mxu0 %v430
        %479 = vmatmul.f32.gmra.mxu0 %v462
        %v480 = vpop.f32.mrf.mxu0
        %v481 = vadd.f32 0.0, %v480
        %482 = vdwg.mxu0
        %483 = vmatpush.xpose.msra.mxu0 %v461
        %484 = vmatpush.xpose.msra.mxu0 %v460
        %485 = vmatpush.xpose.msra.mxu0 %v459
        %486 = vmatpush.xpose.msra.mxu0 %v458
        %487 = vmatpush.xpose.msra.mxu0 %v457
        %488 = vmatpush.xpose.msra.mxu0 %v456
        %489 = vmatpush.xpose.msra.mxu0 %v455
        %490 = vmatpush.xpose.msra.mxu0 %v454
        %491 = vmatpush.xpose.msra.mxu0 %v453
        %492 = vmatpush.xpose.msra.mxu0 %v452
        %493 = vmatpush.xpose.msra.mxu0 %v451
        %494 = vmatpush.xpose.msra.mxu0 %v450
        %495 = vmatpush.xpose.msra.mxu0 %v449
        %496 = vmatpush.xpose.msra.mxu0 %v448
        %497 = vmatpush.xpose.msra.mxu0 %v447
        %498 = vmatpush.xpose.msra.mxu0 %v446
        %499 = vmatmul.f32.gmra.mxu0 %v462
        %v500 = vpop.f32.mrf.mxu0
        %v501 = vadd.f32 0.0, %v500
        %502 = vdwg.mxu0
        %s503 = smul.u32 %s27, 256
        %v506 = vrot.slane %v501, 7
        %vm507 = vcmask 1040384
        %v508 = vsel %vm507, %v481, %v506
        %s510 = sshra.s32 %s503, 7
        %s511 = sand.u32 %s503, 127
        %s512 = scalar_lea.vmem [#allocation2], %s510
        %v513 = vlaneseq
        %vm514 = vcmp.ge.s32.totalorder %v513, 0
        %vm515 = vcmp.lt.s32.totalorder %v513, 256
        %vm516 = vmand %vm514, %vm515
        %517 = vst.msk [vmem:[%s512] sm:$0x3] %vm516, %v508
        %p518 = scmp.eq.s32.totalorder %s27, 0
        // Predicated region
        $region49: #{tpu_custom_call.1} parent=35 // pred_check
          %p519 = pneg %p518
        $region50: #{tpu_custom_call.1} parent=35 // pred_check_branch
          %521 = sbr.rel (%p519) target = $region52
        $region51: #{tpu_custom_call.1} parent=35 // pred_region
          %v522 = vld [vmem:[#allocation2] sm:$0x3]
          %v524 = vperm.slane %v522, 0
          %v525 = vperm.slane %v522, 1
          %v528 = vsel %vm507, %v524, -inf
          %v529 = vsel %vm507, %v525, -inf
          %v530 = vmax.f32 %v528, %v529
          %531 = vmax.xlane.f32.xlu0 %v530
          %v532 = vpop.xlane.xlu0 %531
          %v534 = vperm.slane %v532, 0
          %v536 = vsub.f32 %v522, %v534
          %v537 = vmul.f32 %v536, 1.442695
          %v538 = vpow.pop %v537
          %v540 = vperm.slane %v538, 0
          %v541 = vperm.slane %v538, 1
          %v544 = vsel %vm507, %v540, 0.0
          %v545 = vsel %vm507, %v541, 0.0
          %v546 = vadd.f32 %v544, %v545
          %547 = vadd.xlane.f32.xlu0 %v546
          %v548 = vpop.xlane.xlu0 %547
          %v549 = vrcp.pop %v548
          %v551 = vperm.slane %v549, 0
          %v553 = vmul.f32 %v538, %v551
          %554 = vst.msk [vmem:[%s264] sm:$0x3] %vm516, %v553
        $region52: #{tpu_custom_call.1} parent=35 // pred_fallthru
          _
        %s555 = sand.u32 %s133, 1
        %s556 = scalar_lea.sflag [#allocation5], %s555
        %s557 = sand.u32 %s133, 1
        %s558 = smul.addr %s557, 2
        %s559 = scalar_lea.vmem [#allocation9], %s558
        // Predicated region
        $region53: #{tpu_custom_call.1} parent=35 // pred_check
          %p560 = pneg %p143
        $region54: #{tpu_custom_call.1} parent=35 // pred_check_branch
          %562 = sbr.rel (%p560) target = $region56
        $region55: #{tpu_custom_call.1} parent=35 // pred_region
          %564 = vsyncadd %s556, 0
          %s565 = smul.addr %s26, 2
          %s566 = scalar_lea.hbm %s4, %s565
          %s568 = sshll.u32 %s559, 4
          %s569 = int_to_ptr.vmem [resolvable:$true] %s568
          %s570 = sshll.u32 %s566, 4
          %s571 = int_to_ptr.hbm [resolvable:$true] %s570
          %573 = dma.vmem_to_hbm [thread:$0]  %s569, 32, %s571, %s556
        $region56: #{tpu_custom_call.1} parent=35 // pred_fallthru
          _
      $region36: #{tpu_custom_call.1} parent=5 // pred_fallthru
        _
      %p574 = scmp.le.s32.totalorder 2, %s17
      // Predicated region
      $region57: #{tpu_custom_call.1} parent=5 // pred_check
        %p575 = pneg %p574
      $region58: #{tpu_custom_call.1} parent=5 // pred_check_branch
        %577 = sbr.rel (%p575) target = $region60
      $region59: #{tpu_custom_call.1} parent=5 // pred_region
        %s578 = ssub.s32 %s17, 2
        // Predicated region
        $region61: #{tpu_custom_call.1} parent=59 // pred_check
          %p579 = pneg %p149
        $region62: #{tpu_custom_call.1} parent=59 // pred_check_branch
          %581 = sbr.rel (%p579) target = $region64
        $region63: #{tpu_custom_call.1} parent=59 // pred_region
          %s582 = sand.u32 %s134, 1
          %s583 = scalar_lea.sflag [#allocation5], %s582
          %s584 = sand.u32 %s134, 1
          %s585 = smul.addr %s584, 2
          %s586 = scalar_lea.vmem [#allocation9], %s585
          %588 = dma.done %s583, 32
        $region64: #{tpu_custom_call.1} parent=59 // pred_fallthru
          _
      $region60: #{tpu_custom_call.1} parent=5 // pred_fallthru
        _
    $region6: #{tpu_custom_call.1} parent=1 // loop_footer
      %s21 = sadd.s32 1, %s17
    $region7: #{tpu_custom_call.1} parent=1 // loop_footer_branch
      %16 = sbr.rel target = $region3
    $region8: #{tpu_custom_call.1} parent=1 // loop_exit
      _
    %589 = vsyncpa [#allocation4], 1
    %s590 = scalar_lea.sflag [#allocation4], 1
    %591 = vsyncpa %s590, 1
    %592 = vsyncpa [#allocation7], 1
    %s593 = scalar_lea.sflag [#allocation7], 1
    %594 = vsyncpa %s593, 1
    %595 = vsyncpa [#allocation5], 1
    %s596 = scalar_lea.sflag [#allocation5], 1
    %597 = vsyncpa %s596, 1

</llo_original>
